<compile_context>
chip_gen: v5e
topology: v5e:2x2
jax: 0.10.0
libtpu: 0.0.40
codegen_flags: <defaults>
</compile_context>

<pallas_src>
import math

import jax
import jax.numpy as jnp
from jax.experimental import pallas as pl
from jax.experimental.pallas import tpu as pltpu


def sac_actor_kernel(x_ref, w1_ref, b1_ref, w2_ref, b2_ref, w3_ref, b3_ref, o_ref):
    cdt = w1_ref.dtype  # MXU operand dtype (f32 strict mode or bf16 fast mode)
    x = x_ref[...]
    # Layer 1: Linear + ReLU (f32 accumulation, f32 bias/activation math)
    h1 = jnp.dot(x, w1_ref[...], preferred_element_type=jnp.float32) + b1_ref[...]
    h1 = jnp.maximum(h1, 0.0)
    # Layer 2: Linear + ReLU
    h2 = jnp.dot(h1.astype(cdt), w2_ref[...], preferred_element_type=jnp.float32) + b2_ref[...]
    h2 = jnp.maximum(h2, 0.0)
    # Layer 3 (mean head only, zero-padded to 128 lanes in the wrapper) -> tanh
    y = jnp.dot(h2.astype(cdt), w3_ref[...], preferred_element_type=jnp.float32) + b3_ref[...]
    o_ref[...] = jnp.tanh(y).astype(o_ref.dtype)


def prepare_params(params, compute_dtype=jnp.bfloat16, lane=128):
    """One-time parameter prep (hoisted out of the per-call path):
    slice the mean head of layer 3, zero-pad it to a lane-dense width, and
    cast the matmul operands to the compute dtype (biases stay f32)."""
    w1, b1, w2, b2, w3, b3 = params
    A = w3.shape[-1] // 2
    AP = ((A + lane - 1) // lane) * lane  # lane-dense padded head width (>= 128)
    w3m = w3[:, :A]
    b3m = b3[:, :A]
    if AP > A:
        # Zero padding => padded output columns are tanh(0)=0, sliced off later.
        w3m = jnp.pad(w3m, ((0, 0), (0, AP - A)))
        b3m = jnp.pad(b3m, ((0, 0), (0, AP - A)))
    prepped = (
        w1.astype(compute_dtype), b1.astype(jnp.float32),
        w2.astype(compute_dtype), b2.astype(jnp.float32),
        w3m.astype(compute_dtype), b3m.astype(jnp.float32),
    )
    return prepped, A


def _choose_tiling(batch, tm):
    """Round batch up to 8 sublanes and split it into equal 8-aligned tiles.
    Prefer an even tile count (>= 2) when there's enough work so both of
    v7x's TensorCores get tiles; the extra grid step is harmless on v5e/v6e."""
    b8 = max(8, ((batch + 7) // 8) * 8)
    n_tiles = -(-b8 // tm)
    if b8 >= 512 and n_tiles % 2 == 1:
        n_tiles += 1
    tm_eff = ((-(-b8 // n_tiles) + 7) // 8) * 8
    return tm_eff, n_tiles, n_tiles * tm_eff


def sac_actor_forward(states, prepared_params, action_dim, *, tm=2048):
    """Pallas forward: tanh(mean head) of the SAC actor MLP.

    `prepared_params` must come from prepare_params() (sliced/padded/cast)."""
    w1, b1, w2, b2, w3, b3 = prepared_params
    B, S = states.shape
    H = w1.shape[-1]
    AP = w3.shape[-1]
    cdt = w1.dtype

    x = states.astype(cdt)
    tm_eff, n_tiles, b_pad = _choose_tiling(B, tm)
    if b_pad != B:
        x = jnp.pad(x, ((0, b_pad - B), (0, 0)))

    isz = jnp.dtype(cdt).itemsize
    cost = pl.CostEstimate(
        flops=2 * b_pad * (S * H + H * H + H * AP),
        transcendentals=b_pad * AP,
        bytes_accessed=isz * (b_pad * S + S * H + H * H + H * AP)
        + 4 * (2 * H + AP + b_pad * AP),
    )

    out = pl.pallas_call(
        sac_actor_kernel,
        out_shape=jax.ShapeDtypeStruct((b_pad, AP), jnp.float32),
        grid=(n_tiles,),
        in_specs=[
            pl.BlockSpec((tm_eff, S), lambda i: (i, 0)),   # states: streamed per tile
            pl.BlockSpec((S, H), lambda i: (0, 0)),        # w1: VMEM-resident
            pl.BlockSpec((1, H), lambda i: (0, 0)),        # b1
            pl.BlockSpec((H, H), lambda i: (0, 0)),        # w2
            pl.BlockSpec((1, H), lambda i: (0, 0)),        # b2
            pl.BlockSpec((H, AP), lambda i: (0, 0)),       # w3 (mean head, lane-padded)
            pl.BlockSpec((1, AP), lambda i: (0, 0)),       # b3 (mean head, lane-padded)
        ],
        out_specs=pl.BlockSpec((tm_eff, AP), lambda i: (i, 0)),
        compiler_params=pltpu.CompilerParams(
            dimension_semantics=("parallel",)),
        cost_estimate=cost,
    )(x, w1, b1, w2, b2, w3, b3)

    return out[:B, :action_dim]


def init_linear(key, fan_in, fan_out):
    """Deterministic PyTorch-style Linear init (uniform +-1/sqrt(fan_in))."""
    kw, kb = jax.random.split(key)
    bound = 1.0 / math.sqrt(fan_in)
    w = jax.random.uniform(kw, (fan_in, fan_out), jnp.float32, -bound, bound)
    b = jax.random.uniform(kb, (1, fan_out), jnp.float32, -bound, bound)
    return w, b


def reference_forward(states, params):
    """Plain-JAX reference for correctness checking (mirrors torch forward)."""
    w1, b1, w2, b2, w3, b3 = params
    h1 = jnp.maximum(states @ w1 + b1, 0.0)
    h2 = jnp.maximum(h1 @ w2 + b2, 0.0)
    y = h2 @ w3 + b3
    a = y.shape[-1] // 2
    return jnp.tanh(y[:, :a])


# TODO(synk): SACActor.sample() (reparameterize + calculate_log_pi) is a separate
# RNG/log-prob path and is not part of forward(); not implemented here.

if __name__ == "__main__":
    # Small shapes consistent with the module: state_dim=32, action_dim=8, batch=2
    BATCH, STATE_DIM, ACTION_DIM, HIDDEN = 2, 32, 8, 256

    key = jax.random.PRNGKey(0)
    k_x, k1, k2, k3 = jax.random.split(key, 4)

    states = jax.random.normal(k_x, (BATCH, STATE_DIM), jnp.float32)
    w1, b1 = init_linear(k1, STATE_DIM, HIDDEN)
    w2, b2 = init_linear(k2, HIDDEN, HIDDEN)
    w3, b3 = init_linear(k3, HIDDEN, 2 * ACTION_DIM)
    params = (w1, b1, w2, b2, w3, b3)

    # --- f32 strict mode: exact module semantics, checked at 1e-5. ---
    prep_f32, A = prepare_params(params, compute_dtype=jnp.float32)
    out = jax.block_until_ready(sac_actor_forward(states, prep_f32, A))
    ref = reference_forward(states, params)
    assert out.shape == (BATCH, ACTION_DIM), out.shape
    assert jnp.allclose(out, ref, atol=1e-5, rtol=1e-5), "mismatch vs reference (f32)"

    # Multi-tile + ragged batch: 1030 rows -> 2 tiles of 520 (only 10 padded rows).
    big_states = jax.random.normal(jax.random.PRNGKey(1), (1030, STATE_DIM), jnp.float32)
    big_out = jax.block_until_ready(sac_actor_forward(big_states, prep_f32, A))
    big_ref = reference_forward(big_states, params)
    assert big_out.shape == (1030, ACTION_DIM), big_out.shape
    assert jnp.allclose(big_out, big_ref, atol=1e-5, rtol=1e-5), "mismatch (tiled f32)"

    # --- bf16 fast path (default for throughput): relaxed tolerance. ---
    prep_bf16, _ = prepare_params(params, compute_dtype=jnp.bfloat16)
    fast_out = jax.block_until_ready(sac_actor_forward(big_states, prep_bf16, A))
    assert fast_out.shape == (1030, ACTION_DIM), fast_out.shape
    assert jnp.allclose(fast_out, big_ref, atol=5e-2, rtol=5e-2), "mismatch (bf16 path)"

    print("KERNEL_OK")
</pallas_src>

<mosaic_0001>
module attributes {stable_mosaic.version = 11 : i64} {
  func.func @sac_actor_kernel(%arg0: i32, %arg1: memref<8x32xf32, #tpu.memory_space<vmem>>, %arg2: memref<32x256xf32, #tpu.memory_space<vmem>>, %arg3: memref<1x256xf32, #tpu.memory_space<vmem>>, %arg4: memref<256x256xf32, #tpu.memory_space<vmem>>, %arg5: memref<1x256xf32, #tpu.memory_space<vmem>>, %arg6: memref<256x128xf32, #tpu.memory_space<vmem>>, %arg7: memref<1x128xf32, #tpu.memory_space<vmem>>, %arg8: memref<8x128xf32, #tpu.memory_space<vmem>>) attributes {dimension_semantics = [#tpu.dimension_semantics<parallel>], iteration_bounds = array<i64: 1>, scalar_prefetch = 0 : i64, scratch_operands = 0 : i64, tpu.core_type = #tpu.core_type<tc>, window_params = [{transform_indices = @transform_0, window_bounds = array<i64: 8, 32>}, {pipeline_mode = #tpu.pipeline_mode<synchronous>, transform_indices = @transform_1, window_bounds = array<i64: 32, 256>}, {pipeline_mode = #tpu.pipeline_mode<synchronous>, transform_indices = @transform_2, window_bounds = array<i64: 1, 256>}, {pipeline_mode = #tpu.pipeline_mode<synchronous>, transform_indices = @transform_3, window_bounds = array<i64: 256, 256>}, {pipeline_mode = #tpu.pipeline_mode<synchronous>, transform_indices = @transform_4, window_bounds = array<i64: 1, 256>}, {pipeline_mode = #tpu.pipeline_mode<synchronous>, transform_indices = @transform_5, window_bounds = array<i64: 256, 128>}, {pipeline_mode = #tpu.pipeline_mode<synchronous>, transform_indices = @transform_6, window_bounds = array<i64: 1, 128>}, {transform_indices = @transform_7, window_bounds = array<i64: 8, 128>}]} {
    %c0 = arith.constant 0 : index
    %c0_0 = arith.constant 0 : index
    %0 = vector.load %arg1[%c0, %c0_0] : memref<8x32xf32, #tpu.memory_space<vmem>>, vector<8x32xf32>
    %c0_1 = arith.constant 0 : index
    %c0_2 = arith.constant 0 : index
    %1 = vector.load %arg2[%c0_1, %c0_2] : memref<32x256xf32, #tpu.memory_space<vmem>>, vector<32x256xf32>
    %cst = arith.constant dense<0.000000e+00> : vector<8x256xf32>
    %2 = tpu.matmul %0, %1, %cst {dimension_numbers = #tpu.dot_dimension_numbers<[1], [0], [0], [1], [0, 0, 1, 1], [], []>} : vector<8x32xf32>, vector<32x256xf32>, vector<8x256xf32> -> vector<8x256xf32>
    %c0_3 = arith.constant 0 : index
    %c0_4 = arith.constant 0 : index
    %3 = vector.load %arg3[%c0_3, %c0_4] : memref<1x256xf32, #tpu.memory_space<vmem>>, vector<1x256xf32>
    %4 = vector.broadcast %3 : vector<1x256xf32> to vector<8x256xf32>
    %5 = arith.addf %2, %4 : vector<8x256xf32>
    %cst_5 = arith.constant 0.000000e+00 : f32
    %6 = vector.broadcast %cst_5 : f32 to vector<8x256xf32>
    %7 = arith.maximumf %5, %6 : vector<8x256xf32>
    %c0_6 = arith.constant 0 : index
    %c0_7 = arith.constant 0 : index
    %8 = vector.load %arg4[%c0_6, %c0_7] : memref<256x256xf32, #tpu.memory_space<vmem>>, vector<256x256xf32>
    %cst_8 = arith.constant dense<0.000000e+00> : vector<8x256xf32>
    %9 = tpu.matmul %7, %8, %cst_8 {dimension_numbers = #tpu.dot_dimension_numbers<[1], [0], [0], [1], [0, 0, 1, 1], [], []>} : vector<8x256xf32>, vector<256x256xf32>, vector<8x256xf32> -> vector<8x256xf32>
    %c0_9 = arith.constant 0 : index
    %c0_10 = arith.constant 0 : index
    %10 = vector.load %arg5[%c0_9, %c0_10] : memref<1x256xf32, #tpu.memory_space<vmem>>, vector<1x256xf32>
    %11 = vector.broadcast %10 : vector<1x256xf32> to vector<8x256xf32>
    %12 = arith.addf %9, %11 : vector<8x256xf32>
    %cst_11 = arith.constant 0.000000e+00 : f32
    %13 = vector.broadcast %cst_11 : f32 to vector<8x256xf32>
    %14 = arith.maximumf %12, %13 : vector<8x256xf32>
    %c0_12 = arith.constant 0 : index
    %c0_13 = arith.constant 0 : index
    %15 = vector.load %arg6[%c0_12, %c0_13] : memref<256x128xf32, #tpu.memory_space<vmem>>, vector<256x128xf32>
    %cst_14 = arith.constant dense<0.000000e+00> : vector<8x128xf32>
    %16 = tpu.matmul %14, %15, %cst_14 {dimension_numbers = #tpu.dot_dimension_numbers<[1], [0], [0], [1], [0, 0, 1, 1], [], []>} : vector<8x256xf32>, vector<256x128xf32>, vector<8x128xf32> -> vector<8x128xf32>
    %c0_15 = arith.constant 0 : index
    %c0_16 = arith.constant 0 : index
    %17 = vector.load %arg7[%c0_15, %c0_16] : memref<1x128xf32, #tpu.memory_space<vmem>>, vector<1x128xf32>
    %18 = vector.broadcast %17 : vector<1x128xf32> to vector<8x128xf32>
    %19 = arith.addf %16, %18 : vector<8x128xf32>
    %20 = math.tanh %19 : vector<8x128xf32>
    %c0_17 = arith.constant 0 : index
    %c0_18 = arith.constant 0 : index
    %21 = vector.load %arg8[%c0_17, %c0_18] : memref<8x128xf32, #tpu.memory_space<vmem>>, vector<8x128xf32>
    tpu.vector_store %arg8[%c0_17, %c0_18], %20 {strides = array<i32>} : memref<8x128xf32, #tpu.memory_space<vmem>>, vector<8x128xf32>,
    return
  }
  func.func @transform_0(%arg0: i32) -> (i32, i32) {
    %c0_i32 = arith.constant 0 : i32
    %c0_i32_0 = arith.constant 0 : i32
    return %arg0, %c0_i32 : i32, i32
  }
  func.func @transform_1(%arg0: i32) -> (i32, i32) {
    %c0_i32 = arith.constant 0 : i32
    %c0_i32_0 = arith.constant 0 : i32
    %c0_i32_1 = arith.constant 0 : i32
    return %c0_i32, %c0_i32_0 : i32, i32
  }
  func.func @transform_2(%arg0: i32) -> (i32, i32) {
    %c0_i32 = arith.constant 0 : i32
    %c0_i32_0 = arith.constant 0 : i32
    %c0_i32_1 = arith.constant 0 : i32
    return %c0_i32, %c0_i32_0 : i32, i32
  }
  func.func @transform_3(%arg0: i32) -> (i32, i32) {
    %c0_i32 = arith.constant 0 : i32
    %c0_i32_0 = arith.constant 0 : i32
    %c0_i32_1 = arith.constant 0 : i32
    return %c0_i32, %c0_i32_0 : i32, i32
  }
  func.func @transform_4(%arg0: i32) -> (i32, i32) {
    %c0_i32 = arith.constant 0 : i32
    %c0_i32_0 = arith.constant 0 : i32
    %c0_i32_1 = arith.constant 0 : i32
    return %c0_i32, %c0_i32_0 : i32, i32
  }
  func.func @transform_5(%arg0: i32) -> (i32, i32) {
    %c0_i32 = arith.constant 0 : i32
    %c0_i32_0 = arith.constant 0 : i32
    %c0_i32_1 = arith.constant 0 : i32
    return %c0_i32, %c0_i32_0 : i32, i32
  }
  func.func @transform_6(%arg0: i32) -> (i32, i32) {
    %c0_i32 = arith.constant 0 : i32
    %c0_i32_0 = arith.constant 0 : i32
    %c0_i32_1 = arith.constant 0 : i32
    return %c0_i32, %c0_i32_0 : i32, i32
  }
  func.func @transform_7(%arg0: i32) -> (i32, i32) {
    %c0_i32 = arith.constant 0 : i32
    %c0_i32_0 = arith.constant 0 : i32
    return %arg0, %c0_i32 : i32, i32
  }
}

</mosaic_0001>

<llo_original>
// kernel: tpu_custom_call.1
$region0: #{tpu_custom_call.1}
  #allocation0 [shape = 'u32[]', space=smem, size = 0x4, offset = 0x4, fixed_abs, tag = 'smem constant byte address 0x4 - core index']
  #allocation1 [shape = 'u32[72,128]{1,0:T(1,128)}', space=vmem, size = 0x9000, scoped, tag = 'internal scratch']
  %s0 = inlined_call_operand.hbm [shape: f32[8,32], index: 0, kind: input, shape index: {}]
  %s1 = inlined_call_operand.hbm [shape: f32[32,256], index: 1, kind: input, shape index: {}]
  %s2 = inlined_call_operand.hbm [shape: f32[1,256], index: 2, kind: input, shape index: {}]
  %s3 = inlined_call_operand.hbm [shape: f32[256,256], index: 3, kind: input, shape index: {}]
  %s4 = inlined_call_operand.vmem [shape: f32[1,256], index: 4, kind: input, shape index: {}]
  %s5 = inlined_call_operand.hbm [shape: f32[256,128], index: 5, kind: input, shape index: {}]
  %s6 = inlined_call_operand.vmem [shape: f32[1,128], index: 6, kind: input, shape index: {}]
  %s7 = inlined_call_operand.hbm [shape: f32[8,128], index: 7, kind: output, shape index: {}]
  %s8 = sld [smem:[#allocation0]]
  $region58: #{tpu_custom_call.1} parent=0
    _
  %s10 = ssub.s32 1, %s8
  %s11 = scalar_select 0, %s10, %s8
  $region1: #{tpu_custom_call.1} parent=0
    #allocation2 [shape = 'u8[4096]{0}', space=vmem, size = 0x1000, scoped, tag = 'input window, operand 0, single buffered']
    #allocation3 [shape = 's32[1]{0}', space=sflag, size = 0x4, scoped, tag = 'scoped memory for tpu_custom_call.1']
    #allocation4 [shape = 's32[1]{0}', space=sflag, size = 0x4, scoped, tag = 'scoped memory for tpu_custom_call.1']
    #allocation5 [shape = 'u8[32768]{0}', space=vmem, size = 0x8000, scoped, tag = 'input window, operand 1, single buffered']
    #allocation6 [shape = 's32[1]{0}', space=sflag, size = 0x4, scoped, tag = 'scoped memory for tpu_custom_call.1']
    #allocation7 [shape = 'u8[1024]{0}', space=vmem, size = 0x400, scoped, tag = 'input window, operand 2, single buffered']
    #allocation8 [shape = 'u8[262144]{0}', space=vmem, size = 0x40000, scoped, tag = 'input window, operand 3, single buffered']
    #allocation9 [shape = 's32[1]{0}', space=sflag, size = 0x4, scoped, tag = 'scoped memory for tpu_custom_call.1']
    #allocation10 [shape = 'u8[131072]{0}', space=vmem, size = 0x20000, scoped, tag = 'input window, operand 5, single buffered']
    #allocation11 [shape = 'u8[4096]{0}', space=vmem, size = 0x1000, scoped, tag = 'output window, operand 0, single buffered']
    %12 = vsyncpa [#allocation3], 0
    %13 = vsyncpa [#allocation6], 0
    %14 = vsyncpa [#allocation9], 0
    %15 = vsyncpa [#allocation4], 0
    // Predicated region
    $region2: #{tpu_custom_call.1} parent=1 // pred_check
      _
    $region3: #{tpu_custom_call.1} parent=1 // pred_check_branch
      %17 = sbr.rel (0) target = $region5
    $region4: #{tpu_custom_call.1} parent=1 // pred_region
      %19 = vsyncadd [#allocation3], 0
      %s21 = sshll.u32 %s0, 4
      %s22 = int_to_ptr.hbm [resolvable:$true] %s21
      %s23 = sshll.u32 [#allocation2], 4
      %s24 = int_to_ptr.vmem [resolvable:$true] %s23
      %26 = dma.hbm_to_vmem [thread:$0]  %s22, 128, %s24, [#allocation3]
    $region5: #{tpu_custom_call.1} parent=1 // pred_fallthru
      _
    // Predicated region
    $region6: #{tpu_custom_call.1} parent=1 // pred_check
      _
    $region7: #{tpu_custom_call.1} parent=1 // pred_check_branch
      %28 = sbr.rel (0) target = $region9
    $region8: #{tpu_custom_call.1} parent=1 // pred_region
      %30 = vsyncadd [#allocation6], 0
      %s31 = sshll.u32 %s1, 4
      %s32 = int_to_ptr.hbm [resolvable:$true] %s31
      %s33 = sshll.u32 [#allocation5], 4
      %s34 = int_to_ptr.vmem [resolvable:$true] %s33
      %39 = dma.hbm_to_vmem [thread:$0]  %s32, 1024, %s34, [#allocation6], 256, 256, 16
    $region9: #{tpu_custom_call.1} parent=1 // pred_fallthru
      _
    // Predicated region
    $region10: #{tpu_custom_call.1} parent=1 // pred_check
      _
    $region11: #{tpu_custom_call.1} parent=1 // pred_check_branch
      %41 = sbr.rel (0) target = $region13
    $region12: #{tpu_custom_call.1} parent=1 // pred_region
      %43 = vsyncadd [#allocation6], 0
      %s45 = sshll.u32 %s2, 4
      %s46 = int_to_ptr.hbm [resolvable:$true] %s45
      %s47 = sshll.u32 [#allocation7], 4
      %s48 = int_to_ptr.vmem [resolvable:$true] %s47
      %50 = dma.hbm_to_vmem [thread:$0]  %s46, 32, %s48, [#allocation6]
    $region13: #{tpu_custom_call.1} parent=1 // pred_fallthru
      _
    // Predicated region
    $region14: #{tpu_custom_call.1} parent=1 // pred_check
      _
    $region15: #{tpu_custom_call.1} parent=1 // pred_check_branch
      %52 = sbr.rel (0) target = $region17
    $region16: #{tpu_custom_call.1} parent=1 // pred_region
      %54 = vsyncadd [#allocation9], 0
      %s55 = sshll.u32 %s3, 4
      %s56 = int_to_ptr.hbm [resolvable:$true] %s55
      %s57 = sshll.u32 [#allocation8], 4
      %s58 = int_to_ptr.vmem [resolvable:$true] %s57
      %63 = dma.hbm_to_vmem [thread:$0]  %s56, 8192, %s58, [#allocation9], 256, 256, 16
    $region17: #{tpu_custom_call.1} parent=1 // pred_fallthru
      _
    // Predicated region
    $region18: #{tpu_custom_call.1} parent=1 // pred_check
      _
    $region19: #{tpu_custom_call.1} parent=1 // pred_check_branch
      %65 = sbr.rel (0) target = $region21
    $region20: #{tpu_custom_call.1} parent=1 // pred_region
      _
    $region21: #{tpu_custom_call.1} parent=1 // pred_fallthru
      _
    // Predicated region
    $region22: #{tpu_custom_call.1} parent=1 // pred_check
      _
    $region23: #{tpu_custom_call.1} parent=1 // pred_check_branch
      %67 = sbr.rel (0) target = $region25
    $region24: #{tpu_custom_call.1} parent=1 // pred_region
      %69 = vsyncadd [#allocation9], 0
      %s70 = sshll.u32 %s5, 4
      %s71 = int_to_ptr.hbm [resolvable:$true] %s70
      %s72 = sshll.u32 [#allocation10], 4
      %s73 = int_to_ptr.vmem [resolvable:$true] %s72
      %78 = dma.hbm_to_vmem [thread:$0]  %s71, 4096, %s73, [#allocation9], 128, 128, 8
    $region25: #{tpu_custom_call.1} parent=1 // pred_fallthru
      _
    // Predicated region
    $region26: #{tpu_custom_call.1} parent=1 // pred_check
      _
    $region27: #{tpu_custom_call.1} parent=1 // pred_check_branch
      %80 = sbr.rel (0) target = $region29
    $region28: #{tpu_custom_call.1} parent=1 // pred_region
      _
    $region29: #{tpu_custom_call.1} parent=1 // pred_fallthru
      _
    // Predicated region
    $region30: #{tpu_custom_call.1} parent=1 // pred_check
      _
    $region31: #{tpu_custom_call.1} parent=1 // pred_check_branch
      %82 = sbr.rel (0) target = $region33
    $region32: #{tpu_custom_call.1} parent=1 // pred_region
      %84 = dma.done [#allocation3], 128
    $region33: #{tpu_custom_call.1} parent=1 // pred_fallthru
      _
    // Predicated region
    $region34: #{tpu_custom_call.1} parent=1 // pred_check
      _
    $region35: #{tpu_custom_call.1} parent=1 // pred_check_branch
      %86 = sbr.rel (0) target = $region37
    $region36: #{tpu_custom_call.1} parent=1 // pred_region
      %88 = dma.done [#allocation6], 1024
    $region37: #{tpu_custom_call.1} parent=1 // pred_fallthru
      _
    // Predicated region
    $region38: #{tpu_custom_call.1} parent=1 // pred_check
      _
    $region39: #{tpu_custom_call.1} parent=1 // pred_check_branch
      %90 = sbr.rel (0) target = $region41
    $region40: #{tpu_custom_call.1} parent=1 // pred_region
      %92 = dma.done [#allocation6], 32
    $region41: #{tpu_custom_call.1} parent=1 // pred_fallthru
      _
    // Predicated region
    $region42: #{tpu_custom_call.1} parent=1 // pred_check
      _
    $region43: #{tpu_custom_call.1} parent=1 // pred_check_branch
      %94 = sbr.rel (0) target = $region45
    $region44: #{tpu_custom_call.1} parent=1 // pred_region
      %96 = dma.done [#allocation9], 8192
    $region45: #{tpu_custom_call.1} parent=1 // pred_fallthru
      _
    // Predicated region
    $region46: #{tpu_custom_call.1} parent=1 // pred_check
      _
    $region47: #{tpu_custom_call.1} parent=1 // pred_check_branch
      %98 = sbr.rel (0) target = $region49
    $region48: #{tpu_custom_call.1} parent=1 // pred_region
      %100 = dma.done [#allocation9], 4096
    $region49: #{tpu_custom_call.1} parent=1 // pred_fallthru
      _
    %v101 = vld [vmem:[#allocation2] sm:$0xff]
    %v102 = vld [vmem:[#allocation5] sm:$0xff]
    %v103 = vld [vmem:[#allocation5 + $0x8] sm:$0xff]
    %v104 = vld [vmem:[#allocation5 + $0x10] sm:$0xff]
    %v105 = vld [vmem:[#allocation5 + $0x18] sm:$0xff]
    %v106 = vld [vmem:[#allocation5 + $0x20] sm:$0xff]
    %v107 = vld [vmem:[#allocation5 + $0x28] sm:$0xff]
    %v108 = vld [vmem:[#allocation5 + $0x30] sm:$0xff]
    %v109 = vld [vmem:[#allocation5 + $0x38] sm:$0xff]
    %v110 = vld [vmem:[#allocation7] sm:$0x3]
    %v112 = vperm.slane %v110, 0
    %v113 = vperm.slane %v110, 1
    %vm116 = vcmask 261120
    %v118 = vsel %vm116, %v101, 0
    %120 = vmatpush.msra.mxu0 0.0
    %121 = vmatpush.msra.mxu0 0.0
    %122 = vmatpush.msra.mxu0 0.0
    %123 = vmatpush.msra.mxu0 0.0
    %124 = vmatpush.msra.mxu0 0.0
    %125 = vmatpush.msra.mxu0 0.0
    %126 = vmatpush.msra.mxu0 0.0
    %127 = vmatpush.msra.mxu0 0.0
    %128 = vmatpush.msra.mxu0 0.0
    %129 = vmatpush.msra.mxu0 0.0
    %130 = vmatpush.msra.mxu0 0.0
    %131 = vmatpush.msra.mxu0 0.0
    %132 = vmatpush.msra.mxu0 %v108
    %133 = vmatpush.msra.mxu0 %v106
    %134 = vmatpush.msra.mxu0 %v104
    %135 = vmatpush.msra.mxu0 %v102
    %136 = vmatmul.f32.gmra.mxu0 %v118
    %v137 = vpop.f32.mrf.mxu0
    %v138 = vadd.f32 %v112, %v137
    %139 = vdwg.mxu0
    %140 = vmatpush.msra.mxu0 0.0
    %141 = vmatpush.msra.mxu0 0.0
    %142 = vmatpush.msra.mxu0 0.0
    %143 = vmatpush.msra.mxu0 0.0
    %144 = vmatpush.msra.mxu0 0.0
    %145 = vmatpush.msra.mxu0 0.0
    %146 = vmatpush.msra.mxu0 0.0
    %147 = vmatpush.msra.mxu0 0.0
    %148 = vmatpush.msra.mxu0 0.0
    %149 = vmatpush.msra.mxu0 0.0
    %150 = vmatpush.msra.mxu0 0.0
    %151 = vmatpush.msra.mxu0 0.0
    %152 = vmatpush.msra.mxu0 %v109
    %153 = vmatpush.msra.mxu0 %v107
    %154 = vmatpush.msra.mxu0 %v105
    %155 = vmatpush.msra.mxu0 %v103
    %156 = vmatmul.f32.gmra.mxu0 %v118
    %v157 = vpop.f32.mrf.mxu0
    %v158 = vadd.f32 %v113, %v157
    %159 = vdwg.mxu0
    %v160 = vmax.f32 %v138, 0.0
    %v161 = vmax.f32 %v158, 0.0
    %v162 = vld [vmem:[#allocation8] sm:$0xff]
    %v163 = vld [vmem:[#allocation8 + $0x8] sm:$0xff]
    %v164 = vld [vmem:[#allocation8 + $0x10] sm:$0xff]
    %v165 = vld [vmem:[#allocation8 + $0x18] sm:$0xff]
    %v166 = vld [vmem:[#allocation8 + $0x20] sm:$0xff]
    %v167 = vld [vmem:[#allocation8 + $0x28] sm:$0xff]
    %v168 = vld [vmem:[#allocation8 + $0x30] sm:$0xff]
    %v169 = vld [vmem:[#allocation8 + $0x38] sm:$0xff]
    %v170 = vld [vmem:[#allocation8 + $0x40] sm:$0xff]
    %v171 = vld [vmem:[#allocation8 + $0x48] sm:$0xff]
    %v172 = vld [vmem:[#allocation8 + $0x50] sm:$0xff]
    %v173 = vld [vmem:[#allocation8 + $0x58] sm:$0xff]
    %v174 = vld [vmem:[#allocation8 + $0x60] sm:$0xff]
    %v175 = vld [vmem:[#allocation8 + $0x68] sm:$0xff]
    %v176 = vld [vmem:[#allocation8 + $0x70] sm:$0xff]
    %v177 = vld [vmem:[#allocation8 + $0x78] sm:$0xff]
    %v178 = vld [vmem:[#allocation8 + $0x80] sm:$0xff]
    %v179 = vld [vmem:[#allocation8 + $0x88] sm:$0xff]
    %v180 = vld [vmem:[#allocation8 + $0x90] sm:$0xff]
    %v181 = vld [vmem:[#allocation8 + $0x98] sm:$0xff]
    %v182 = vld [vmem:[#allocation8 + $0xa0] sm:$0xff]
    %v183 = vld [vmem:[#allocation8 + $0xa8] sm:$0xff]
    %v184 = vld [vmem:[#allocation8 + $0xb0] sm:$0xff]
    %v185 = vld [vmem:[#allocation8 + $0xb8] sm:$0xff]
    %v186 = vld [vmem:[#allocation8 + $0xc0] sm:$0xff]
    %v187 = vld [vmem:[#allocation8 + $0xc8] sm:$0xff]
    %v188 = vld [vmem:[#allocation8 + $0xd0] sm:$0xff]
    %v189 = vld [vmem:[#allocation8 + $0xd8] sm:$0xff]
    %v190 = vld [vmem:[#allocation8 + $0xe0] sm:$0xff]
    %v191 = vld [vmem:[#allocation8 + $0xe8] sm:$0xff]
    %v192 = vld [vmem:[#allocation8 + $0xf0] sm:$0xff]
    %v193 = vld [vmem:[#allocation8 + $0xf8] sm:$0xff]
    %v194 = vld [vmem:[#allocation8 + $0x100] sm:$0xff]
    %v195 = vld [vmem:[#allocation8 + $0x108] sm:$0xff]
    %v196 = vld [vmem:[#allocation8 + $0x110] sm:$0xff]
    %v197 = vld [vmem:[#allocation8 + $0x118] sm:$0xff]
    %v198 = vld [vmem:[#allocation8 + $0x120] sm:$0xff]
    %v199 = vld [vmem:[#allocation8 + $0x128] sm:$0xff]
    %v200 = vld [vmem:[#allocation8 + $0x130] sm:$0xff]
    %v201 = vld [vmem:[#allocation8 + $0x138] sm:$0xff]
    %v202 = vld [vmem:[#allocation8 + $0x140] sm:$0xff]
    %v203 = vld [vmem:[#allocation8 + $0x148] sm:$0xff]
    %v204 = vld [vmem:[#allocation8 + $0x150] sm:$0xff]
    %v205 = vld [vmem:[#allocation8 + $0x158] sm:$0xff]
    %v206 = vld [vmem:[#allocation8 + $0x160] sm:$0xff]
    %v207 = vld [vmem:[#allocation8 + $0x168] sm:$0xff]
    %v208 = vld [vmem:[#allocation8 + $0x170] sm:$0xff]
    %v209 = vld [vmem:[#allocation8 + $0x178] sm:$0xff]
    %v210 = vld [vmem:[#allocation8 + $0x180] sm:$0xff]
    %v211 = vld [vmem:[#allocation8 + $0x188] sm:$0xff]
    %v212 = vld [vmem:[#allocation8 + $0x190] sm:$0xff]
    %v213 = vld [vmem:[#allocation8 + $0x198] sm:$0xff]
    %v214 = vld [vmem:[#allocation8 + $0x1a0] sm:$0xff]
    %v215 = vld [vmem:[#allocation8 + $0x1a8] sm:$0xff]
    %v216 = vld [vmem:[#allocation8 + $0x1b0] sm:$0xff]
    %v217 = vld [vmem:[#allocation8 + $0x1b8] sm:$0xff]
    %v218 = vld [vmem:[#allocation8 + $0x1c0] sm:$0xff]
    %v219 = vld [vmem:[#allocation8 + $0x1c8] sm:$0xff]
    %v220 = vld [vmem:[#allocation8 + $0x1d0] sm:$0xff]
    %v221 = vld [vmem:[#allocation8 + $0x1d8] sm:$0xff]
    %v222 = vld [vmem:[#allocation8 + $0x1e0] sm:$0xff]
    %v223 = vld [vmem:[#allocation8 + $0x1e8] sm:$0xff]
    %v224 = vld [vmem:[#allocation8 + $0x1f0] sm:$0xff]
    %v225 = vld [vmem:[#allocation8 + $0x1f8] sm:$0xff]
    %v226 = vld [vmem:[%s4] sm:$0x3]
    %v228 = vperm.slane %v226, 0
    %v229 = vperm.slane %v226, 1
    %232 = vmatpush.msra.mxu0 %v192
    %233 = vmatpush.msra.mxu0 %v190
    %234 = vmatpush.msra.mxu0 %v188
    %235 = vmatpush.msra.mxu0 %v186
    %236 = vmatpush.msra.mxu0 %v184
    %237 = vmatpush.msra.mxu0 %v182
    %238 = vmatpush.msra.mxu0 %v180
    %239 = vmatpush.msra.mxu0 %v178
    %240 = vmatpush.msra.mxu0 %v176
    %241 = vmatpush.msra.mxu0 %v174
    %242 = vmatpush.msra.mxu0 %v172
    %243 = vmatpush.msra.mxu0 %v170
    %244 = vmatpush.msra.mxu0 %v168
    %245 = vmatpush.msra.mxu0 %v166
    %246 = vmatpush.msra.mxu0 %v164
    %247 = vmatpush.msra.mxu0 %v162
    %248 = vmatmul.f32.gmra.mxu0 %v160
    %v249 = vpop.f32.mrf.mxu0
    %v250 = vadd.f32 %v228, %v249
    %251 = vdwg.mxu0
    %252 = vmatpush.msra.mxu0 %v224
    %253 = vmatpush.msra.mxu0 %v222
    %254 = vmatpush.msra.mxu0 %v220
    %255 = vmatpush.msra.mxu0 %v218
    %256 = vmatpush.msra.mxu0 %v216
    %257 = vmatpush.msra.mxu0 %v214
    %258 = vmatpush.msra.mxu0 %v212
    %259 = vmatpush.msra.mxu0 %v210
    %260 = vmatpush.msra.mxu0 %v208
    %261 = vmatpush.msra.mxu0 %v206
    %262 = vmatpush.msra.mxu0 %v204
    %263 = vmatpush.msra.mxu0 %v202
    %264 = vmatpush.msra.mxu0 %v200
    %265 = vmatpush.msra.mxu0 %v198
    %266 = vmatpush.msra.mxu0 %v196
    %267 = vmatpush.msra.mxu0 %v194
    %268 = vmatmul.f32.gmra.mxu0 %v161
    %v269 = vpop.f32.mrf.mxu0
    %v270 = vadd.f32 %v250, %v269
    %271 = vdwg.mxu0
    %272 = vmatpush.msra.mxu0 %v193
    %273 = vmatpush.msra.mxu0 %v191
    %274 = vmatpush.msra.mxu0 %v189
    %275 = vmatpush.msra.mxu0 %v187
    %276 = vmatpush.msra.mxu0 %v185
    %277 = vmatpush.msra.mxu0 %v183
    %278 = vmatpush.msra.mxu0 %v181
    %279 = vmatpush.msra.mxu0 %v179
    %280 = vmatpush.msra.mxu0 %v177
    %281 = vmatpush.msra.mxu0 %v175
    %282 = vmatpush.msra.mxu0 %v173
    %283 = vmatpush.msra.mxu0 %v171
    %284 = vmatpush.msra.mxu0 %v169
    %285 = vmatpush.msra.mxu0 %v167
    %286 = vmatpush.msra.mxu0 %v165
    %287 = vmatpush.msra.mxu0 %v163
    %288 = vmatmul.f32.gmra.mxu0 %v160
    %v289 = vpop.f32.mrf.mxu0
    %v290 = vadd.f32 %v229, %v289
    %291 = vdwg.mxu0
    %292 = vmatpush.msra.mxu0 %v225
    %293 = vmatpush.msra.mxu0 %v223
    %294 = vmatpush.msra.mxu0 %v221
    %295 = vmatpush.msra.mxu0 %v219
    %296 = vmatpush.msra.mxu0 %v217
    %297 = vmatpush.msra.mxu0 %v215
    %298 = vmatpush.msra.mxu0 %v213
    %299 = vmatpush.msra.mxu0 %v211
    %300 = vmatpush.msra.mxu0 %v209
    %301 = vmatpush.msra.mxu0 %v207
    %302 = vmatpush.msra.mxu0 %v205
    %303 = vmatpush.msra.mxu0 %v203
    %304 = vmatpush.msra.mxu0 %v201
    %305 = vmatpush.msra.mxu0 %v199
    %306 = vmatpush.msra.mxu0 %v197
    %307 = vmatpush.msra.mxu0 %v195
    %308 = vmatmul.f32.gmra.mxu0 %v161
    %v309 = vpop.f32.mrf.mxu0
    %v310 = vadd.f32 %v290, %v309
    %311 = vdwg.mxu0
    %v312 = vmax.f32 %v270, 0.0
    %v313 = vmax.f32 %v310, 0.0
    %v314 = vld [vmem:[#allocation10] sm:$0xff]
    %v315 = vld [vmem:[#allocation10 + $0x8] sm:$0xff]
    %v316 = vld [vmem:[#allocation10 + $0x10] sm:$0xff]
    %v317 = vld [vmem:[#allocation10 + $0x18] sm:$0xff]
    %v318 = vld [vmem:[#allocation10 + $0x20] sm:$0xff]
    %v319 = vld [vmem:[#allocation10 + $0x28] sm:$0xff]
    %v320 = vld [vmem:[#allocation10 + $0x30] sm:$0xff]
    %v321 = vld [vmem:[#allocation10 + $0x38] sm:$0xff]
    %v322 = vld [vmem:[#allocation10 + $0x40] sm:$0xff]
    %v323 = vld [vmem:[#allocation10 + $0x48] sm:$0xff]
    %v324 = vld [vmem:[#allocation10 + $0x50] sm:$0xff]
    %v325 = vld [vmem:[#allocation10 + $0x58] sm:$0xff]
    %v326 = vld [vmem:[#allocation10 + $0x60] sm:$0xff]
    %v327 = vld [vmem:[#allocation10 + $0x68] sm:$0xff]
    %v328 = vld [vmem:[#allocation10 + $0x70] sm:$0xff]
    %v329 = vld [vmem:[#allocation10 + $0x78] sm:$0xff]
    %v330 = vld [vmem:[#allocation10 + $0x80] sm:$0xff]
    %v331 = vld [vmem:[#allocation10 + $0x88] sm:$0xff]
    %v332 = vld [vmem:[#allocation10 + $0x90] sm:$0xff]
    %v333 = vld [vmem:[#allocation10 + $0x98] sm:$0xff]
    %v334 = vld [vmem:[#allocation10 + $0xa0] sm:$0xff]
    %v335 = vld [vmem:[#allocation10 + $0xa8] sm:$0xff]
    %v336 = vld [vmem:[#allocation10 + $0xb0] sm:$0xff]
    %v337 = vld [vmem:[#allocation10 + $0xb8] sm:$0xff]
    %v338 = vld [vmem:[#allocation10 + $0xc0] sm:$0xff]
    %v339 = vld [vmem:[#allocation10 + $0xc8] sm:$0xff]
    %v340 = vld [vmem:[#allocation10 + $0xd0] sm:$0xff]
    %v341 = vld [vmem:[#allocation10 + $0xd8] sm:$0xff]
    %v342 = vld [vmem:[#allocation10 + $0xe0] sm:$0xff]
    %v343 = vld [vmem:[#allocation10 + $0xe8] sm:$0xff]
    %v344 = vld [vmem:[#allocation10 + $0xf0] sm:$0xff]
    %v345 = vld [vmem:[#allocation10 + $0xf8] sm:$0xff]
    %v346 = vld [vmem:[%s6] sm:$0x1]
    %v348 = vperm.slane %v346, 0
    %350 = vmatpush.msra.mxu0 %v329
    %351 = vmatpush.msra.mxu0 %v328
    %352 = vmatpush.msra.mxu0 %v327
    %353 = vmatpush.msra.mxu0 %v326
    %354 = vmatpush.msra.mxu0 %v325
    %355 = vmatpush.msra.mxu0 %v324
    %356 = vmatpush.msra.mxu0 %v323
    %357 = vmatpush.msra.mxu0 %v322
    %358 = vmatpush.msra.mxu0 %v321
    %359 = vmatpush.msra.mxu0 %v320
    %360 = vmatpush.msra.mxu0 %v319
    %361 = vmatpush.msra.mxu0 %v318
    %362 = vmatpush.msra.mxu0 %v317
    %363 = vmatpush.msra.mxu0 %v316
    %364 = vmatpush.msra.mxu0 %v315
    %365 = vmatpush.msra.mxu0 %v314
    %366 = vmatmul.f32.gmra.mxu0 %v312
    %v367 = vpop.f32.mrf.mxu0
    %v368 = vadd.f32 %v348, %v367
    %369 = vdwg.mxu0
    %370 = vmatpush.msra.mxu0 %v345
    %371 = vmatpush.msra.mxu0 %v344
    %372 = vmatpush.msra.mxu0 %v343
    %373 = vmatpush.msra.mxu0 %v342
    %374 = vmatpush.msra.mxu0 %v341
    %375 = vmatpush.msra.mxu0 %v340
    %376 = vmatpush.msra.mxu0 %v339
    %377 = vmatpush.msra.mxu0 %v338
    %378 = vmatpush.msra.mxu0 %v337
    %379 = vmatpush.msra.mxu0 %v336
    %380 = vmatpush.msra.mxu0 %v335
    %381 = vmatpush.msra.mxu0 %v334
    %382 = vmatpush.msra.mxu0 %v333
    %383 = vmatpush.msra.mxu0 %v332
    %384 = vmatpush.msra.mxu0 %v331
    %385 = vmatpush.msra.mxu0 %v330
    %386 = vmatmul.f32.gmra.mxu0 %v313
    %v387 = vpop.f32.mrf.mxu0
    %v388 = vadd.f32 %v368, %v387
    %389 = vdwg.mxu0
    %v390 = vtanh.pop %v388
    %391 = vst [vmem:[#allocation11] sm:$0xff] %v390
    // Predicated region
    $region50: #{tpu_custom_call.1} parent=1 // pred_check
      _
    $region51: #{tpu_custom_call.1} parent=1 // pred_check_branch
      %393 = sbr.rel (0) target = $region53
    $region52: #{tpu_custom_call.1} parent=1 // pred_region
      %395 = vsyncadd [#allocation4], 0
      %s397 = sshll.u32 [#allocation11], 4
      %s398 = int_to_ptr.vmem [resolvable:$true] %s397
      %s399 = sshll.u32 %s7, 4
      %s400 = int_to_ptr.hbm [resolvable:$true] %s399
      %402 = dma.vmem_to_hbm [thread:$0]  %s398, 128, %s400, [#allocation4]
    $region53: #{tpu_custom_call.1} parent=1 // pred_fallthru
      _
    // Predicated region
    $region54: #{tpu_custom_call.1} parent=1 // pred_check
      _
    $region55: #{tpu_custom_call.1} parent=1 // pred_check_branch
      %404 = sbr.rel (0) target = $region57
    $region56: #{tpu_custom_call.1} parent=1 // pred_region
      %406 = dma.done [#allocation4], 128
    $region57: #{tpu_custom_call.1} parent=1 // pred_fallthru
      _
    %407 = vsyncpa [#allocation3], 1
    %408 = vsyncpa [#allocation6], 1
    %409 = vsyncpa [#allocation9], 1
    %410 = vsyncpa [#allocation4], 1

</llo_original>
